<compile_context>
chip_gen: v7x
topology: tpu7x:2x2x1
jax: 0.10.0
libtpu: 0.0.40
codegen_flags: <defaults>
</compile_context>

<pallas_src>
import jax
import jax.numpy as jnp
from jax.experimental import pallas as pl
from jax.experimental.pallas import tpu as pltpu


# ----------------------------------------------------------------------------
# Plain-JAX glue: 3-NN inverse-distance feature interpolation
# ----------------------------------------------------------------------------

def square_distance(src, dst):
    # src: (B, N, C), dst: (B, M, C) -> (B, N, M)
    dist = -2.0 * jnp.matmul(src, jnp.transpose(dst, (0, 2, 1)))
    dist = dist + jnp.sum(src ** 2, -1)[..., None]
    dist = dist + jnp.sum(dst ** 2, -1)[:, None, :]
    return dist


def index_points(points, idx):
    # points: (B, S, C); idx: (B, N) or (B, N, k) -> gathered points
    return jax.vmap(lambda p, i: p[i])(points, idx)


def _interpolate_and_concat(xyz1, xyz2, points1, points2):
    """xyz1 (B,3,N), xyz2 (B,3,S), points1 (B,D1,N) or None, points2 (B,D2,S)
    -> channels-last features (B, N, D1 + D2)."""
    xyz1_t = jnp.transpose(xyz1, (0, 2, 1))       # (B, N, 3)
    xyz2_t = jnp.transpose(xyz2, (0, 2, 1))       # (B, S, 3)
    pts2_t = jnp.transpose(points2, (0, 2, 1))    # (B, S, D2)

    dists = square_distance(xyz1_t, xyz2_t)       # (B, N, S)
    neg_d3, idx = jax.lax.top_k(-dists, 3)        # 3 smallest distances (cheaper than argsort)
    d3 = -neg_d3
    dist_recip = 1.0 / (d3 + 1e-8)
    norm = jnp.sum(dist_recip, axis=2, keepdims=True)
    weight = dist_recip / norm
    interpolated = jnp.sum(index_points(pts2_t, idx) * weight[..., None], axis=2)  # (B,N,D2)

    if points1 is not None:
        pts1_t = jnp.transpose(points1, (0, 2, 1))  # (B, N, D1)
        return jnp.concatenate([pts1_t, interpolated], axis=-1)
    return interpolated


# ----------------------------------------------------------------------------
# Pallas kernels
# ----------------------------------------------------------------------------

def _round_up(x, m):
    return ((x + m - 1) // m) * m


def _make_layer_kernel(fuse_norm, n_points, row_tile, tiles_per_batch, n_inner, mask_possible):
    """One shared-MLP layer pass over row tiles:
       (optional fused prev-layer folded-BN scale/shift + ReLU) -> bf16 MXU matmul (f32 acc)
       -> bf16 activation writeback + per-channel sum / sum-of-squares partials per core.

    Ref order:
      fused:  (x, scale, shift, w, y, sum, sq)
      else:   (x, w, y, sum, sq)
    """

    def kernel(*refs):
        if fuse_norm:
            x_ref, scale_ref, shift_ref, w_ref, y_ref, sum_ref, sq_ref = refs
        else:
            x_ref, w_ref, y_ref, sum_ref, sq_ref = refs
        c = pl.program_id(0)   # megacore ("parallel") axis
        i = pl.program_id(1)   # row-tile ("arbitrary") axis

        if fuse_norm:
            # Previous layer's training-mode BN folded into one scale/shift FMA + ReLU (f32),
            # then narrowed to bf16 MXU operands.  Padded rows are NOT zeroed here: the 1x1
            # conv is row-wise so they never mix into real rows; they are excluded from the
            # statistics below and sliced away at the very end.
            x = jnp.maximum(x_ref[...].astype(jnp.float32) * scale_ref[...] + shift_ref[...],
                            0.0)
            x = x.astype(jnp.bfloat16)
        else:
            x = x_ref[...]      # layer-0 input is already zero-padded bf16

        # 1x1 conv == MXU matmul (bf16 operands, f32 accumulation).  Conv bias omitted:
        # it cancels exactly against training-mode BN mean subtraction.
        y = jnp.dot(x, w_ref[...], preferred_element_type=jnp.float32)
        # bf16 inter-layer activation (halves the dominant HBM stream); BN statistics below
        # still use the f32 accumulator.
        y_ref[...] = y.astype(y_ref.dtype)

        @pl.when(i == 0)
        def _init():
            sum_ref[...] = jnp.zeros_like(sum_ref)
            sq_ref[...] = jnp.zeros_like(sq_ref)

        if mask_possible:
            # Only the last row tile of each batch slot contains padded rows; interior tiles
            # accumulate with no iota/compare/select work.
            t = c * n_inner + i
            wbo = (t % tiles_per_batch) * row_tile   # within-batch row offset of this tile
            tile_is_tail = (wbo + row_tile) > n_points

            @pl.when(jnp.logical_not(tile_is_tail))
            def _acc_full():
                sum_ref[0:1, :] += jnp.sum(y, axis=0, keepdims=True)
                sq_ref[0:1, :] += jnp.sum(y * y, axis=0, keepdims=True)

            @pl.when(tile_is_tail)
            def _acc_masked():
                row = jax.lax.broadcasted_iota(jnp.int32, (row_tile, 1), 0)
                keep = row < (n_points - wbo)
                ym = jnp.where(keep, y, 0.0)
                sum_ref[0:1, :] += jnp.sum(ym, axis=0, keepdims=True)
                sq_ref[0:1, :] += jnp.sum(ym * ym, axis=0, keepdims=True)
        else:
            sum_ref[0:1, :] += jnp.sum(y, axis=0, keepdims=True)
            sq_ref[0:1, :] += jnp.sum(y * y, axis=0, keepdims=True)

    return kernel


def _norm_relu_transpose_kernel(y_ref, scale_ref, shift_ref, out_ref):
    # Last layer's folded BN + ReLU, fused with the channels-last -> channels-first transpose
    # (XLU slot) so the (B, C, N) module output needs no extra XLA transpose pass.
    h = jnp.maximum(y_ref[...].astype(jnp.float32) * scale_ref[...] + shift_ref[...], 0.0)
    out_ref[0, :, :] = jnp.transpose(h, (1, 0))


def mlp_bn_relu_pallas(x, prepared, *, row_tile=None, eps=1e-5):
    """x: (B, N, C_in) f32 channels-last point features.
    prepared: list of (w_pad (ci_pad, co_pad) bf16, gamma_pad (1, co_pad) f32,
                       beta_pad (1, co_pad) f32, c_out).
    Returns (B, c_out_last, N) f32 (channels-first, like the PyTorch module)."""
    B, N, c_in = x.shape
    M = B * N

    # Generation-aware VMEM budget / row tiling (v5e & v6e: 128 MiB VMEM; v7x: 64 MiB/TC).
    try:
        vmem_cap = int(pltpu.get_tpu_info().vmem_capacity_bytes)
    except Exception:
        vmem_cap = 64 * 1024 * 1024
    vmem_limit = min(vmem_cap * 3 // 4, 96 * 1024 * 1024)
    if row_tile is None:
        row_tile = 2048 if vmem_cap > 64 * 1024 * 1024 else 1024
    row_tile = max(128, _round_up(int(row_tile), 128))   # lane-dense transposed stores
    row_tile = min(row_tile, _round_up(N, 128))          # don't over-pad small point counts

    # Per-batch padded row layout: row = b * n_pad + n.  Every row tile lies inside a single
    # batch slot, so the final kernel can emit (B, C, N) blocks directly while all matmul
    # passes run on a flat row grid.
    n_pad = _round_up(N, row_tile)
    tiles_per_batch = n_pad // row_tile
    n_tiles = B * tiles_per_batch
    num_cores = 2 if n_tiles % 2 == 0 else 1   # megacore split (v7x); harmless elsewhere
    n_inner = n_tiles // num_cores
    m_pad = n_tiles * row_tile                 # == B * n_pad
    mask_possible = n_pad != N

    c_in_pad = prepared[0][0].shape[0]
    assert c_in <= c_in_pad
    cur = (jnp.zeros((B, n_pad, c_in_pad), jnp.bfloat16)
           .at[:, :N, :c_in].set(x.astype(jnp.bfloat16))
           .reshape(m_pad, c_in_pad))
    cur_c_pad = c_in_pad
    scale = shift = None

    row_map = lambda c, i: (c * n_inner + i, 0)
    const_map = lambda c, i: (0, 0)
    core_map = lambda c, i: (c, 0)

    for l, (w_pad, gamma_pad, beta_pad, _c_out) in enumerate(prepared):
        ci_pad, co_pad = w_pad.shape
        assert ci_pad == cur_c_pad
        fused = l > 0
        kernel = _make_layer_kernel(fused, N, row_tile, tiles_per_batch, n_inner,
                                    mask_possible)

        in_specs = [pl.BlockSpec((row_tile, cur_c_pad), row_map)]
        inputs = [cur]
        if fused:
            in_specs += [pl.BlockSpec((1, cur_c_pad), const_map),
                         pl.BlockSpec((1, cur_c_pad), const_map)]
            inputs += [scale, shift]
        in_specs.append(pl.BlockSpec((cur_c_pad, co_pad), const_map))
        inputs.append(w_pad)

        # Per-core stat partials are padded to 8 sublanes so blocks obey the (8, 128) rule;
        # only row 0 of each core's block is written.
        out_shape = (jax.ShapeDtypeStruct((m_pad, co_pad), jnp.bfloat16),
                     jax.ShapeDtypeStruct((num_cores * 8, co_pad), jnp.float32),
                     jax.ShapeDtypeStruct((num_cores * 8, co_pad), jnp.float32))
        out_specs = (pl.BlockSpec((row_tile, co_pad), row_map),
                     pl.BlockSpec((8, co_pad), core_map),
                     pl.BlockSpec((8, co_pad), core_map))

        cost = pl.CostEstimate(
            flops=2 * m_pad * cur_c_pad * co_pad + 6 * m_pad * co_pad,
            transcendentals=0,
            bytes_accessed=(m_pad * cur_c_pad * 2 + w_pad.size * 2
                            + m_pad * co_pad * 2 + 2 * num_cores * 8 * co_pad * 4))

        y, s_sum, s_sq = pl.pallas_call(
            kernel,
            grid=(num_cores, n_inner),
            in_specs=in_specs,
            out_specs=out_specs,
            out_shape=out_shape,
            compiler_params=pltpu.CompilerParams(
                # stats are a cross-tile reduction along the inner axis; the outer axis is a
                # per-core ("parallel") split with per-core stat partials
                dimension_semantics=("parallel", "arbitrary"),
                vmem_limit_bytes=vmem_limit),
            cost_estimate=cost,
        )(*inputs)

        # Fold training-mode BN (biased var, eps) into one per-channel scale/shift on tiny
        # (1, C) vectors; applied fused inside the next layer's kernel (or the epilogue).
        mean = jnp.sum(s_sum, axis=0, keepdims=True) / jnp.float32(M)
        ex2 = jnp.sum(s_sq, axis=0, keepdims=True) / jnp.float32(M)
        var = jnp.maximum(ex2 - mean * mean, 0.0)
        scale = gamma_pad * jax.lax.rsqrt(var + eps)
        shift = beta_pad - mean * scale

        cur = y
        cur_c_pad = co_pad

    # Final folded-BN + ReLU fused with the channels-last -> channels-first transpose, so the
    # (B, C, N) module output is written directly (saves two full HBM epilogue passes).
    out_pad = pl.pallas_call(
        _norm_relu_transpose_kernel,
        grid=(n_tiles,),
        in_specs=[pl.BlockSpec((row_tile, cur_c_pad), lambda i: (i, 0)),
                  pl.BlockSpec((1, cur_c_pad), lambda i: (0, 0)),
                  pl.BlockSpec((1, cur_c_pad), lambda i: (0, 0))],
        out_specs=pl.BlockSpec((1, cur_c_pad, row_tile),
                               lambda i: (i // tiles_per_batch, 0, i % tiles_per_batch)),
        out_shape=jax.ShapeDtypeStruct((B, cur_c_pad, n_pad), jnp.float32),
        compiler_params=pltpu.CompilerParams(
            dimension_semantics=("parallel",),
            vmem_limit_bytes=vmem_limit),
        cost_estimate=pl.CostEstimate(
            flops=3 * m_pad * cur_c_pad, transcendentals=0,
            bytes_accessed=m_pad * cur_c_pad * 6),
    )(cur, scale, shift)

    c_last = prepared[-1][3]
    return out_pad[:, :c_last, :N]


# ----------------------------------------------------------------------------
# Full module forward
# ----------------------------------------------------------------------------

def pointnet_feature_propagation(xyz1, xyz2, points1, points2, prepared_params, *,
                                 row_tile=None):
    """xyz1: (B,3,N), xyz2: (B,3,S), points1: (B,D1,N) or None, points2: (B,D2,S)
    -> (B, mlp[-1], N).  Matches the PyTorch module's training-mode forward."""
    # TODO(synk): eval-mode BatchNorm (running_mean/var) and the Conv1d bias (which only
    # cancels under training-mode BN mean subtraction) are not implemented.
    new_points = _interpolate_and_concat(xyz1, xyz2, points1, points2)   # (B, N, C)
    return mlp_bn_relu_pallas(new_points.astype(jnp.float32), prepared_params,
                              row_tile=row_tile)


# ----------------------------------------------------------------------------
# Deterministic parameter init + init-time preprocessing (hoisted out of forward)
# ----------------------------------------------------------------------------

def init_params(key, in_channel, mlp):
    # Conv1d bias is intentionally not materialized: under training-mode BN it cancels.
    params = []
    last = in_channel
    for out_c in mlp:
        key, kw = jax.random.split(key)
        w = jax.random.normal(kw, (last, out_c), dtype=jnp.float32) * 0.1  # (in, out)
        gamma = jnp.ones((out_c,), jnp.float32)
        beta = jnp.zeros((out_c,), jnp.float32)
        params.append((w, gamma, beta))
        last = out_c
    return params


def prepare_mlp_params(params):
    """Init-time preprocessing: pad channels to 128-multiples (lane-dense vregs, unmasked
    stores) and cast weights to bf16 MXU operands."""
    prepared = []
    for (w, gamma, beta) in params:
        ci, co = w.shape
        ci_pad, co_pad = _round_up(ci, 128), _round_up(co, 128)
        w_pad = jnp.zeros((ci_pad, co_pad), jnp.bfloat16).at[:ci, :co].set(
            w.astype(jnp.bfloat16))
        gamma_pad = jnp.zeros((1, co_pad), jnp.float32).at[0, :co].set(gamma)
        beta_pad = jnp.zeros((1, co_pad), jnp.float32).at[0, :co].set(beta)
        prepared.append((w_pad, gamma_pad, beta_pad, co))
    return prepared


# ----------------------------------------------------------------------------
# Pure-JAX reference (same math: bf16 matmuls + bf16 inter-layer activations, f32 stats)
# ----------------------------------------------------------------------------

def _mlp_bn_relu_ref(x, params, eps=1e-5):
    h = x.astype(jnp.bfloat16)
    out = None
    for (w, gamma, beta) in params:
        y = jnp.dot(h, w.astype(jnp.bfloat16), preferred_element_type=jnp.float32)
        mean = jnp.mean(y, axis=0, keepdims=True)
        var = jnp.maximum(jnp.mean(y * y, axis=0, keepdims=True) - mean * mean, 0.0)
        scale = gamma[None, :] * jax.lax.rsqrt(var + eps)
        shift = beta[None, :] - mean * scale
        y16 = y.astype(jnp.bfloat16).astype(jnp.float32)   # kernel stores bf16 activations
        out = jnp.maximum(y16 * scale + shift, 0.0)
        h = out.astype(jnp.bfloat16)
    return out


if __name__ == "__main__":
    key = jax.random.PRNGKey(0)
    B, N, S, D1, D2 = 2, 200, 16, 4, 8
    mlp = [16, 32]
    in_channel = D1 + D2

    k1, k2, k3, k4, kp = jax.random.split(key, 5)
    xyz1 = jax.random.uniform(k1, (B, 3, N), dtype=jnp.float32)
    xyz2 = jax.random.uniform(k2, (B, 3, S), dtype=jnp.float32)
    points1 = jax.random.normal(k3, (B, D1, N), dtype=jnp.float32)
    points2 = jax.random.normal(k4, (B, D2, S), dtype=jnp.float32)
    params = init_params(kp, in_channel, mlp)
    prepared = prepare_mlp_params(params)

    # row_tile=128 at this small size so the run exercises the 2-way "parallel" core split,
    # multi-tile stats accumulation, and the tail-tile masking path (N=200 -> n_pad=256).
    out = pointnet_feature_propagation(xyz1, xyz2, points1, points2, prepared, row_tile=128)
    out = jax.block_until_ready(out)
    assert out.shape == (B, mlp[-1], N), out.shape

    # Cross-check the Pallas MLP against a pure-JAX reference of the same math.
    feats = _interpolate_and_concat(xyz1, xyz2, points1, points2)
    x_flat = feats.reshape(B * N, in_channel).astype(jnp.float32)
    ref = _mlp_bn_relu_ref(x_flat, params)
    got = jnp.transpose(out, (0, 2, 1)).reshape(B * N, mlp[-1])
    err = float(jnp.max(jnp.abs(got - ref)))
    assert bool(jnp.allclose(got, ref, atol=2e-2, rtol=2e-2)), err

    print("KERNEL_OK")
</pallas_src>

<mosaic_0001>
module attributes {stable_mosaic.version = 11 : i64} {
  func.func @kernel(%arg0: i32, %arg1: i32, %arg2: memref<128x128xbf16, #tpu.memory_space<vmem>>, %arg3: memref<128x128xbf16, #tpu.memory_space<vmem>>, %arg4: memref<128x128xbf16, #tpu.memory_space<vmem>>, %arg5: memref<8x128xf32, #tpu.memory_space<vmem>>, %arg6: memref<8x128xf32, #tpu.memory_space<vmem>>) attributes {dimension_semantics = [#tpu.dimension_semantics<parallel>, #tpu.dimension_semantics<arbitrary>], iteration_bounds = array<i64: 2, 2>, scalar_prefetch = 0 : i64, scratch_operands = 0 : i64, tpu.core_type = #tpu.core_type<tc>, window_params = [{transform_indices = @transform_0, window_bounds = array<i64: 128, 128>}, {pipeline_mode = #tpu.pipeline_mode<synchronous>, transform_indices = @transform_1, window_bounds = array<i64: 128, 128>}, {transform_indices = @transform_2, window_bounds = array<i64: 128, 128>}, {transform_indices = @transform_3, window_bounds = array<i64: 8, 128>}, {transform_indices = @transform_4, window_bounds = array<i64: 8, 128>}]} {
    %c0 = arith.constant 0 : index
    %c0_0 = arith.constant 0 : index
    %0 = vector.load %arg2[%c0, %c0_0] : memref<128x128xbf16, #tpu.memory_space<vmem>>, vector<128x128xbf16>
    %c0_1 = arith.constant 0 : index
    %c0_2 = arith.constant 0 : index
    %1 = vector.load %arg3[%c0_1, %c0_2] : memref<128x128xbf16, #tpu.memory_space<vmem>>, vector<128x128xbf16>
    %cst = arith.constant dense<0.000000e+00> : vector<128x128xf32>
    %2 = tpu.matmul %0, %1, %cst {dimension_numbers = #tpu.dot_dimension_numbers<[1], [0], [0], [1], [0, 0, 1, 1], [], []>} : vector<128x128xbf16>, vector<128x128xbf16>, vector<128x128xf32> -> vector<128x128xf32>
    %3 = arith.truncf %2 : vector<128x128xf32> to vector<128x128xbf16>
    %c0_3 = arith.constant 0 : index
    %c0_4 = arith.constant 0 : index
    %4 = vector.load %arg4[%c0_3, %c0_4] : memref<128x128xbf16, #tpu.memory_space<vmem>>, vector<128x128xbf16>
    tpu.vector_store %arg4[%c0_3, %c0_4], %3 {strides = array<i32>} : memref<128x128xbf16, #tpu.memory_space<vmem>>, vector<128x128xbf16>,
    %c0_i32 = arith.constant 0 : i32
    %5 = arith.cmpi eq, %arg1, %c0_i32 : i32
    %6 = arith.extui %5 : i1 to i32
    %c0_i32_5 = arith.constant 0 : i32
    %7 = arith.cmpi ne, %6, %c0_i32_5 : i32
    scf.if %7 {
      %cst_14 = arith.constant 0.000000e+00 : f32
      %28 = vector.broadcast %cst_14 : f32 to vector<8x128xf32>
      %c0_15 = arith.constant 0 : index
      %c0_16 = arith.constant 0 : index
      %29 = vector.load %arg5[%c0_15, %c0_16] : memref<8x128xf32, #tpu.memory_space<vmem>>, vector<8x128xf32>
      tpu.vector_store %arg5[%c0_15, %c0_16], %28 {strides = array<i32>} : memref<8x128xf32, #tpu.memory_space<vmem>>, vector<8x128xf32>,
      %cst_17 = arith.constant 0.000000e+00 : f32
      %30 = vector.broadcast %cst_17 : f32 to vector<8x128xf32>
      %c0_18 = arith.constant 0 : index
      %c0_19 = arith.constant 0 : index
      %31 = vector.load %arg6[%c0_18, %c0_19] : memref<8x128xf32, #tpu.memory_space<vmem>>, vector<8x128xf32>
      tpu.vector_store %arg6[%c0_18, %c0_19], %30 {strides = array<i32>} : memref<8x128xf32, #tpu.memory_space<vmem>>, vector<8x128xf32>,
    } else {
    }
    %c2_i32 = arith.constant 2 : i32
    %8 = arith.muli %arg0, %c2_i32 : i32
    %9 = arith.addi %8, %arg1 : i32
    %c2_i32_6 = arith.constant 2 : i32
    %c0_i32_7 = arith.constant 0 : i32
    %10 = arith.cmpi eq, %c2_i32_6, %c0_i32_7 : i32
    %c1_i32 = arith.constant 1 : i32
    %11 = arith.select %10, %c1_i32, %c2_i32_6 : i32
    %12 = arith.remsi %9, %11 : i32
    %c0_i32_8 = arith.constant 0 : i32
    %13 = arith.cmpi ne, %12, %c0_i32_8 : i32
    %c0_i32_9 = arith.constant 0 : i32
    %14 = arith.cmpi slt, %12, %c0_i32_9 : i32
    %c0_i32_10 = arith.constant 0 : i32
    %15 = arith.cmpi slt, %11, %c0_i32_10 : i32
    %16 = arith.xori %14, %15 : i1
    %17 = arith.andi %16, %13 : i1
    %18 = arith.addi %12, %11 : i32
    %19 = arith.select %17, %18, %12 : i32
    %c128_i32 = arith.constant 128 : i32
    %20 = arith.muli %19, %c128_i32 : i32
    %c128_i32_11 = arith.constant 128 : i32
    %21 = arith.addi %20, %c128_i32_11 : i32
    %c200_i32 = arith.constant 200 : i32
    %22 = arith.cmpi sgt, %21, %c200_i32 : i32
    %true = arith.constant true
    %23 = arith.xori %22, %true : i1
    %24 = arith.extui %23 : i1 to i32
    %c0_i32_12 = arith.constant 0 : i32
    %25 = arith.cmpi ne, %24, %c0_i32_12 : i32
    scf.if %25 {
      %c0_14 = arith.constant 0 : index
      %c0_15 = arith.constant 0 : index
      %28 = vector.load %arg5[%c0_14, %c0_15] : memref<8x128xf32, #tpu.memory_space<vmem>>, vector<1x128xf32>
      %cst_16 = arith.constant dense<0.000000e+00> : vector<128xf32>
      %29 = vector.multi_reduction <add>, %2, %cst_16 [0] : vector<128x128xf32> to vector<128xf32>
      %30 = vector.shape_cast %29 : vector<128xf32> to vector<1x128xf32>
      %31 = arith.addf %28, %30 : vector<1x128xf32>
      %c0_17 = arith.constant 0 : index
      %c0_18 = arith.constant 0 : index
      %32 = vector.load %arg5[%c0_17, %c0_18] : memref<8x128xf32, #tpu.memory_space<vmem>>, vector<1x128xf32>
      tpu.vector_store %arg5[%c0_17, %c0_18], %31 {strides = array<i32>} : memref<8x128xf32, #tpu.memory_space<vmem>>, vector<1x128xf32>,
      %c0_19 = arith.constant 0 : index
      %c0_20 = arith.constant 0 : index
      %33 = vector.load %arg6[%c0_19, %c0_20] : memref<8x128xf32, #tpu.memory_space<vmem>>, vector<1x128xf32>
      %34 = arith.mulf %2, %2 : vector<128x128xf32>
      %cst_21 = arith.constant dense<0.000000e+00> : vector<128xf32>
      %35 = vector.multi_reduction <add>, %34, %cst_21 [0] : vector<128x128xf32> to vector<128xf32>
      %36 = vector.shape_cast %35 : vector<128xf32> to vector<1x128xf32>
      %37 = arith.addf %33, %36 : vector<1x128xf32>
      %c0_22 = arith.constant 0 : index
      %c0_23 = arith.constant 0 : index
      %38 = vector.load %arg6[%c0_22, %c0_23] : memref<8x128xf32, #tpu.memory_space<vmem>>, vector<1x128xf32>
      tpu.vector_store %arg6[%c0_22, %c0_23], %37 {strides = array<i32>} : memref<8x128xf32, #tpu.memory_space<vmem>>, vector<1x128xf32>,
    } else {
    }
    %26 = arith.extui %22 : i1 to i32
    %c0_i32_13 = arith.constant 0 : i32
    %27 = arith.cmpi ne, %26, %c0_i32_13 : i32
    scf.if %27 {
      %28 = tpu.iota {dimensions = array<i32: 0>} : vector<128x1xi32>
      %c200_i32_14 = arith.constant 200 : i32
      %29 = arith.subi %c200_i32_14, %20 : i32
      %30 = vector.broadcast %29 : i32 to vector<128x1xi32>
      %31 = arith.cmpi slt, %28, %30 : vector<128x1xi32>
      %cst_15 = arith.constant 0.000000e+00 : f32
      %32 = vector.shape_cast %31 : vector<128x1xi1> to vector<128x1xi1>
      %33 = vector.broadcast %32 : vector<128x1xi1> to vector<128x128xi1>
      %34 = vector.broadcast %cst_15 : f32 to vector<128x128xf32>
      %35 = arith.select %33, %2, %34 : vector<128x128xi1>, vector<128x128xf32>
      %c0_16 = arith.constant 0 : index
      %c0_17 = arith.constant 0 : index
      %36 = vector.load %arg5[%c0_16, %c0_17] : memref<8x128xf32, #tpu.memory_space<vmem>>, vector<1x128xf32>
      %cst_18 = arith.constant dense<0.000000e+00> : vector<128xf32>
      %37 = vector.multi_reduction <add>, %35, %cst_18 [0] : vector<128x128xf32> to vector<128xf32>
      %38 = vector.shape_cast %37 : vector<128xf32> to vector<1x128xf32>
      %39 = arith.addf %36, %38 : vector<1x128xf32>
      %c0_19 = arith.constant 0 : index
      %c0_20 = arith.constant 0 : index
      %40 = vector.load %arg5[%c0_19, %c0_20] : memref<8x128xf32, #tpu.memory_space<vmem>>, vector<1x128xf32>
      tpu.vector_store %arg5[%c0_19, %c0_20], %39 {strides = array<i32>} : memref<8x128xf32, #tpu.memory_space<vmem>>, vector<1x128xf32>,
      %c0_21 = arith.constant 0 : index
      %c0_22 = arith.constant 0 : index
      %41 = vector.load %arg6[%c0_21, %c0_22] : memref<8x128xf32, #tpu.memory_space<vmem>>, vector<1x128xf32>
      %42 = arith.mulf %35, %35 : vector<128x128xf32>
      %cst_23 = arith.constant dense<0.000000e+00> : vector<128xf32>
      %43 = vector.multi_reduction <add>, %42, %cst_23 [0] : vector<128x128xf32> to vector<128xf32>
      %44 = vector.shape_cast %43 : vector<128xf32> to vector<1x128xf32>
      %45 = arith.addf %41, %44 : vector<1x128xf32>
      %c0_24 = arith.constant 0 : index
      %c0_25 = arith.constant 0 : index
      %46 = vector.load %arg6[%c0_24, %c0_25] : memref<8x128xf32, #tpu.memory_space<vmem>>, vector<1x128xf32>
      tpu.vector_store %arg6[%c0_24, %c0_25], %45 {strides = array<i32>} : memref<8x128xf32, #tpu.memory_space<vmem>>, vector<1x128xf32>,
    } else {
    }
    return
  }
  func.func @transform_0(%arg0: i32, %arg1: i32) -> (i32, i32) {
    %c2_i32 = arith.constant 2 : i32
    %0 = arith.muli %arg0, %c2_i32 : i32
    %1 = arith.addi %0, %arg1 : i32
    %c0_i32 = arith.constant 0 : i32
    %c0_i32_0 = arith.constant 0 : i32
    return %1, %c0_i32 : i32, i32
  }
  func.func @transform_1(%arg0: i32, %arg1: i32) -> (i32, i32) {
    %c0_i32 = arith.constant 0 : i32
    %c0_i32_0 = arith.constant 0 : i32
    %c0_i32_1 = arith.constant 0 : i32
    return %c0_i32, %c0_i32_0 : i32, i32
  }
  func.func @transform_2(%arg0: i32, %arg1: i32) -> (i32, i32) {
    %c2_i32 = arith.constant 2 : i32
    %0 = arith.muli %arg0, %c2_i32 : i32
    %1 = arith.addi %0, %arg1 : i32
    %c0_i32 = arith.constant 0 : i32
    %c0_i32_0 = arith.constant 0 : i32
    return %1, %c0_i32 : i32, i32
  }
  func.func @transform_3(%arg0: i32, %arg1: i32) -> (i32, i32) {
    %c0_i32 = arith.constant 0 : i32
    %c0_i32_0 = arith.constant 0 : i32
    return %arg0, %c0_i32 : i32, i32
  }
  func.func @transform_4(%arg0: i32, %arg1: i32) -> (i32, i32) {
    %c0_i32 = arith.constant 0 : i32
    %c0_i32_0 = arith.constant 0 : i32
    return %arg0, %c0_i32 : i32, i32
  }
}

</mosaic_0001>

<llo_original>
// kernel: tpu_custom_call.1
$region0: #{tpu_custom_call.1}
  #allocation0 [shape = 'u32[]', space=smem, size = 0x4, offset = 0x4, fixed_abs, tag = 'smem constant byte address 0x4 - core index']
  #allocation1 [shape = 'u32[144,128]{1,0:T(1,128)}', space=vmem, size = 0x12000, scoped, tag = 'internal scratch']
  %s0 = inlined_call_operand.hbm [shape: bf16[512,128], index: 0, kind: input, shape index: {}]
  %s1 = inlined_call_operand.hbm [shape: bf16[128,128], index: 1, kind: input, shape index: {}]
  %s2 = inlined_call_operand.hbm [shape: bf16[512,128], index: 2, kind: output, shape index: {0}]
  %s3 = inlined_call_operand.hbm [shape: f32[16,128], index: 3, kind: output, shape index: {1}]
  %s4 = inlined_call_operand.hbm [shape: f32[16,128], index: 4, kind: output, shape index: {2}]
  %5 = xla_tuple %s2, %s3, %s4
  %s6 = sld [smem:[#allocation0]]
  $region77: #{tpu_custom_call.1} parent=0
    _
  %s8 = ssub.s32 1, %s6
  %s9 = scalar_select 0, %s8, %s6
  $region1: #{tpu_custom_call.1} parent=0
    #allocation2 [shape = 'u8[65536]{0}', space=vmem, size = 0x10000, scoped, tag = 'input window, operand 0']
    #allocation3 [shape = 's32[2]{0}', space=sflag, size = 0x8, scoped, tag = 'scoped memory for tpu_custom_call.1']
    #allocation4 [shape = 's32[2]{0}', space=sflag, size = 0x8, scoped, tag = 'scoped memory for tpu_custom_call.1']
    #allocation5 [shape = 'u8[32768]{0}', space=vmem, size = 0x8000, scoped, tag = 'input window, operand 1, single buffered']
    #allocation6 [shape = 's32[1]{0}', space=sflag, size = 0x4, scoped, tag = 'scoped memory for tpu_custom_call.1']
    #allocation7 [shape = 'u8[65536]{0}', space=vmem, size = 0x10000, scoped, tag = 'output window, operand 0']
    #allocation8 [shape = 'u8[8192]{0}', space=vmem, size = 0x2000, scoped, tag = 'output window, operand 1']
    #allocation9 [shape = 's32[2]{0}', space=sflag, size = 0x8, scoped, tag = 'scoped memory for tpu_custom_call.1']
    #allocation10 [shape = 'u8[8192]{0}', space=vmem, size = 0x2000, scoped, tag = 'output window, operand 2']
    %10 = vsyncpa [#allocation3], 0
    %s11 = scalar_lea.sflag [#allocation3], 1
    %12 = vsyncpa %s11, 0
    %13 = vsyncpa [#allocation6], 0
    %14 = vsyncpa [#allocation4], 0
    %s15 = scalar_lea.sflag [#allocation4], 1
    %16 = vsyncpa %s15, 0
    %17 = vsyncpa [#allocation9], 0
    %s18 = scalar_lea.sflag [#allocation9], 1
    %19 = vsyncpa %s18, 0
    loop: start=0, step=1, limit=6
    $region2: #{tpu_custom_call.1} parent=1 // loop_pre_header
      _
    $region3: #{tpu_custom_call.1} parent=1 // loop_header
      %s21 = sphi 0, %s25
      %p22 = scmp.ge.s32.totalorder %s21, 6
      %s28 = sphi 0, %s40
      %s29 = sphi 0, %s36
      %s30 = sphi 0, %s28
      %s31 = sphi 0, %s29
      %s32 = sphi 0, %s30
      %s33 = sphi 0, %s31
      %s47 = sphi 0, %s49
      %s50 = sphi 0, %s47
      %s51 = sphi 0, %s50
      %s67 = sphi 0, %s51
      %s71 = sphi 0, %s71
      %s73 = sphi 0, %s71
      %s74 = sphi 0, %s73
      %s88 = sphi 0, %s74
      %s98 = sphi 0, %s100
      %s101 = sphi 0, %s98
      %s102 = sphi 0, %s101
      %s118 = sphi 0, %s102
      %s124 = sphi 0, %s126
      %s127 = sphi 0, %s124
      %s128 = sphi 0, %s127
      %s144 = sphi 0, %s128
      %s150 = sphi 0, %s152
      %s153 = sphi 0, %s150
      %s154 = sphi 0, %s153
      %s170 = sphi 0, %s154
    $region4: #{tpu_custom_call.1} parent=1 // loop_header_branch
      %24 = sbr.rel (%p22) target = $region8
    $region5: #{tpu_custom_call.1} parent=1 // loop_body
      %s26 = ssub.s32 %s21, 1
      %s27 = ssub.s32 %s21, 2
      %s34 = sadd.s32 1, %s29
      %p35 = scmp.ge.s32.totalorder %s34, 2
      %s36 = scalar_select %p35, 0, %s34
      %s37 = sadd.s32 1, %s28
      %s38 = scalar_select %p35, %s37, %s28
      %p39 = scmp.ge.s32.totalorder %s38, 2
      %s40 = scalar_select %p39, 0, %s38
      %s41 = smul.u32 %s28, 2
      %s42 = sadd.s32 %s41, %s29
      %s43 = smul.u32 %s40, 2
      %s44 = sadd.s32 %s43, %s36
      %s45 = ssub.s32 %s42, %s44
      %p46 = scmp.eq.s32.totalorder %s45, 0
      %s48 = sadd.s32 %s47, 1
      %s49 = scalar_select %p46, %s47, %s48
      %p52 = pneg %p46
      %p53 = scmp.eq.s32.totalorder %s21, 3
      %p54 = por %p52, %p53
      %p55 = scmp.ne.s32.totalorder %s47, %s50
      %p56 = scmp.eq.s32.totalorder %s21, 0
      %p57 = por %p55, %p56
      %p58 = scmp.ne.s32.totalorder %s47, %s50
      %p59 = scmp.eq.s32.totalorder %s26, 3
      %p60 = por %p58, %p59
      %p61 = scmp.ne.s32.totalorder %s50, %s51
      %p62 = scmp.eq.s32.totalorder %s26, 0
      %p63 = por %p61, %p62
      %p64 = scmp.ne.s32.totalorder %s50, %s51
      %p65 = scmp.eq.s32.totalorder %s27, 3
      %p66 = por %p64, %p65
      %p68 = scmp.ne.s32.totalorder %s51, %s67
      %p69 = scmp.eq.s32.totalorder %s27, 0
      %p70 = por %p68, %p69
      %s72 = sadd.s32 %s71, 1
      %p75 = scmp.eq.s32.totalorder %s21, 3
      %p76 = scmp.ne.s32.totalorder %s71, %s73
      %p77 = scmp.eq.s32.totalorder %s21, 0
      %p78 = por %p76, %p77
      %p79 = scmp.ne.s32.totalorder %s71, %s73
      %p80 = scmp.eq.s32.totalorder %s26, 3
      %p81 = por %p79, %p80
      %p82 = scmp.ne.s32.totalorder %s73, %s74
      %p83 = scmp.eq.s32.totalorder %s26, 0
      %p84 = por %p82, %p83
      %p85 = scmp.ne.s32.totalorder %s73, %s74
      %p86 = scmp.eq.s32.totalorder %s27, 3
      %p87 = por %p85, %p86
      %p89 = scmp.ne.s32.totalorder %s74, %s88
      %p90 = scmp.eq.s32.totalorder %s27, 0
      %p91 = por %p89, %p90
      %s92 = smul.u32 %s28, 2
      %s93 = sadd.s32 %s92, %s29
      %s94 = smul.u32 %s40, 2
      %s95 = sadd.s32 %s94, %s36
      %s96 = ssub.s32 %s93, %s95
      %p97 = scmp.eq.s32.totalorder %s96, 0
      %s99 = sadd.s32 %s98, 1
      %s100 = scalar_select %p97, %s98, %s99
      %p103 = pneg %p97
      %p104 = scmp.eq.s32.totalorder %s21, 3
      %p105 = por %p103, %p104
      %p106 = scmp.ne.s32.totalorder %s98, %s101
      %p107 = scmp.eq.s32.totalorder %s21, 0
      %p108 = por %p106, %p107
      %p109 = scmp.ne.s32.totalorder %s98, %s101
      %p110 = scmp.eq.s32.totalorder %s26, 3
      %p111 = por %p109, %p110
      %p112 = scmp.ne.s32.totalorder %s101, %s102
      %p113 = scmp.eq.s32.totalorder %s26, 0
      %p114 = por %p112, %p113
      %p115 = scmp.ne.s32.totalorder %s101, %s102
      %p116 = scmp.eq.s32.totalorder %s27, 3
      %p117 = por %p115, %p116
      %p119 = scmp.ne.s32.totalorder %s102, %s118
      %p120 = scmp.eq.s32.totalorder %s27, 0
      %p121 = por %p119, %p120
      %s122 = ssub.s32 %s28, %s40
      %p123 = scmp.eq.s32.totalorder %s122, 0
      %s125 = sadd.s32 %s124, 1
      %s126 = scalar_select %p123, %s124, %s125
      %p129 = pneg %p123
      %p130 = scmp.eq.s32.totalorder %s21, 3
      %p131 = por %p129, %p130
      %p132 = scmp.ne.s32.totalorder %s124, %s127
      %p133 = scmp.eq.s32.totalorder %s21, 0
      %p134 = por %p132, %p133
      %p135 = scmp.ne.s32.totalorder %s124, %s127
      %p136 = scmp.eq.s32.totalorder %s26, 3
      %p137 = por %p135, %p136
      %p138 = scmp.ne.s32.totalorder %s127, %s128
      %p139 = scmp.eq.s32.totalorder %s26, 0
      %p140 = por %p138, %p139
      %p141 = scmp.ne.s32.totalorder %s127, %s128
      %p142 = scmp.eq.s32.totalorder %s27, 3
      %p143 = por %p141, %p142
      %p145 = scmp.ne.s32.totalorder %s128, %s144
      %p146 = scmp.eq.s32.totalorder %s27, 0
      %p147 = por %p145, %p146
      %s148 = ssub.s32 %s28, %s40
      %p149 = scmp.eq.s32.totalorder %s148, 0
      %s151 = sadd.s32 %s150, 1
      %s152 = scalar_select %p149, %s150, %s151
      %p155 = pneg %p149
      %p156 = scmp.eq.s32.totalorder %s21, 3
      %p157 = por %p155, %p156
      %p158 = scmp.ne.s32.totalorder %s150, %s153
      %p159 = scmp.eq.s32.totalorder %s21, 0
      %p160 = por %p158, %p159
      %p161 = scmp.ne.s32.totalorder %s150, %s153
      %p162 = scmp.eq.s32.totalorder %s26, 3
      %p163 = por %p161, %p162
      %p164 = scmp.ne.s32.totalorder %s153, %s154
      %p165 = scmp.eq.s32.totalorder %s26, 0
      %p166 = por %p164, %p165
      %p167 = scmp.ne.s32.totalorder %s153, %s154
      %p168 = scmp.eq.s32.totalorder %s27, 3
      %p169 = por %p167, %p168
      %p171 = scmp.ne.s32.totalorder %s154, %s170
      %p172 = scmp.eq.s32.totalorder %s27, 0
      %p173 = por %p171, %p172
      %p174 = scmp.le.s32.totalorder 1, %s21
      %p175 = scmp.lt.s32.totalorder %s21, 5
      %p176 = pnand %p174, %p175
      %p177 = pneg %p176
      // Predicated region
      $region9: #{tpu_custom_call.1} parent=5 // pred_check
        _
      $region10: #{tpu_custom_call.1} parent=5 // pred_check_branch
        %179 = sbr.rel (%p176) target = $region12
      $region11: #{tpu_custom_call.1} parent=5 // pred_region
        %s180 = ssub.s32 %s21, 1
        // Predicated region
        $region13: #{tpu_custom_call.1} parent=11 // pred_check
          %p181 = pneg %p84
        $region14: #{tpu_custom_call.1} parent=11 // pred_check_branch
          %183 = sbr.rel (%p181) target = $region16
        $region15: #{tpu_custom_call.1} parent=11 // pred_region
          %s185 = ssub.s32 1024, 1024
          %186 = vsyncadd [#allocation6], %s185
          %s187 = sshll.u32 [#allocation5], 4
          %s188 = int_to_ptr.vmem [resolvable:$true] %s187
          %193 = dma.hbm_to_vmem [thread:$0]  %s1, 1024, %s188, [#allocation6], 64, 64, 4
        $region16: #{tpu_custom_call.1} parent=11 // pred_fallthru
          _
      $region12: #{tpu_custom_call.1} parent=5 // pred_fallthru
        _
      %p194 = scmp.lt.s32.totalorder %s21, 4
      // Predicated region
      $region17: #{tpu_custom_call.1} parent=5 // pred_check
        %p195 = pneg %p194
      $region18: #{tpu_custom_call.1} parent=5 // pred_check_branch
        %197 = sbr.rel (%p195) target = $region20
      $region19: #{tpu_custom_call.1} parent=5 // pred_region
        // Predicated region
        $region21: #{tpu_custom_call.1} parent=19 // pred_check
          %p198 = pneg %p57
        $region22: #{tpu_custom_call.1} parent=19 // pred_check_branch
          %200 = sbr.rel (%p198) target = $region24
        $region23: #{tpu_custom_call.1} parent=19 // pred_region
          %s201 = sand.u32 %s47, 1
          %s202 = scalar_lea.sflag [#allocation3], %s201
          %s203 = sand.u32 %s47, 1
          %s204 = smul.addr %s203, 64
          %s205 = scalar_lea.vmem [#allocation2], %s204
          %s206 = smul.u32 %s28, 2
          %s207 = sadd.s32 %s206, %s29
          %s208 = smul.u32 16, %s207
          %s210 = ssub.s32 1024, 1024
          %211 = vsyncadd %s202, %s210
          %s212 = smul.addr %s208, 64
          %s213 = scalar_lea.hbm %s0, %s212
          %s214 = sshll.u32 %s205, 4
          %s215 = int_to_ptr.vmem [resolvable:$true] %s214
          %220 = dma.hbm_to_vmem [thread:$0]  %s213, 1024, %s215, %s202, 64, 64, 4
        $region24: #{tpu_custom_call.1} parent=19 // pred_fallthru
          _
      $region20: #{tpu_custom_call.1} parent=5 // pred_fallthru
        _
      %p221 = scmp.le.s32.totalorder 1, %s21
      %p222 = scmp.lt.s32.totalorder %s21, 5
      %p223 = pnand %p221, %p222
      %p224 = pneg %p223
      // Predicated region
      $region25: #{tpu_custom_call.1} parent=5 // pred_check
        _
      $region26: #{tpu_custom_call.1} parent=5 // pred_check_branch
        %226 = sbr.rel (%p223) target = $region28
      $region27: #{tpu_custom_call.1} parent=5 // pred_region
        %s227 = ssub.s32 %s21, 1
        %s228 = sand.u32 %s50, 1
        %s229 = scalar_lea.sflag [#allocation3], %s228
        %s230 = sand.u32 %s50, 1
        %s231 = smul.addr %s230, 64
        %s232 = scalar_lea.vmem [#allocation2], %s231
        // Predicated region
        $region29: #{tpu_custom_call.1} parent=27 // pred_check
          %p233 = pneg %p63
        $region30: #{tpu_custom_call.1} parent=27 // pred_check_branch
          %235 = sbr.rel (%p233) target = $region32
        $region31: #{tpu_custom_call.1} parent=27 // pred_region
          %236 = dma.done %s229, 1024
        $region32: #{tpu_custom_call.1} parent=27 // pred_fallthru
          _
        // Predicated region
        $region33: #{tpu_custom_call.1} parent=27 // pred_check
          %p237 = pneg %p84
        $region34: #{tpu_custom_call.1} parent=27 // pred_check_branch
          %239 = sbr.rel (%p237) target = $region36
        $region35: #{tpu_custom_call.1} parent=27 // pred_region
          %240 = dma.done [#allocation6], 1024
        $region36: #{tpu_custom_call.1} parent=27 // pred_fallthru
          _
        %s241 = sand.u32 %s50, 1
        %s242 = scalar_lea.sflag [#allocation3], %s241
        %s243 = sand.u32 %s50, 1
        %s244 = smul.addr %s243, 64
        %s245 = scalar_lea.vmem [#allocation2], %s244
        %p246 = pneg %p63
        %p247 = pneg %p60
        %p248 = pneg %p84
        %p249 = pneg %p81
        %p250 = pneg %p114
        %p251 = pneg %p111
        %s252 = sand.u32 %s101, 1
        %s253 = scalar_lea.sflag [#allocation4], %s252
        %s254 = sand.u32 %s101, 1
        %s255 = smul.addr %s254, 64
        %s256 = scalar_lea.vmem [#allocation7], %s255
        %p257 = pneg %p140
        %p258 = pneg %p137
        %s259 = sand.u32 %s26, 1
        %s260 = scalar_lea.sflag [#allocation9], %s259
        %s261 = sand.u32 %s127, 1
        %s262 = smul.addr %s261, 8
        %s263 = scalar_lea.vmem [#allocation8], %s262
        %p264 = pneg %p166
        %p265 = pneg %p163
        %s266 = sand.u32 %s26, 1
        %s267 = scalar_lea.sflag [#allocation9], %s266
        %s268 = sand.u32 %s153, 1
        %s269 = smul.addr %s268, 8
        %s270 = scalar_lea.vmem [#allocation10], %s269
        %s271 = smul.u32 %s30, 2
        %s272 = sadd.s32 %s271, %s31
        %s273 = smul.u32 16, %s272
        %s274 = smul.u32 %s30, 2
        %s275 = sadd.s32 %s274, %s31
        %s276 = smul.u32 16, %s275
        %v278 = vld [vmem:[%s232] sm:$0xf]
        %v279 = vld [vmem:[%s232 + $0x4] sm:$0xf]
        %v280 = vld [vmem:[%s232 + $0x8] sm:$0xf]
        %v281 = vld [vmem:[%s232 + $0xc] sm:$0xf]
        %v282 = vld [vmem:[%s232 + $0x10] sm:$0xf]
        %v283 = vld [vmem:[%s232 + $0x14] sm:$0xf]
        %v284 = vld [vmem:[%s232 + $0x18] sm:$0xf]
        %v285 = vld [vmem:[%s232 + $0x1c] sm:$0xf]
        %v286 = vld [vmem:[%s232 + $0x20] sm:$0xf]
        %v287 = vld [vmem:[%s232 + $0x24] sm:$0xf]
        %v288 = vld [vmem:[%s232 + $0x28] sm:$0xf]
        %v289 = vld [vmem:[%s232 + $0x2c] sm:$0xf]
        %v290 = vld [vmem:[%s232 + $0x30] sm:$0xf]
        %v291 = vld [vmem:[%s232 + $0x34] sm:$0xf]
        %v292 = vld [vmem:[%s232 + $0x38] sm:$0xf]
        %v293 = vld [vmem:[%s232 + $0x3c] sm:$0xf]
        %v294 = vld [vmem:[#allocation5] sm:$0xf]
        %v295 = vld [vmem:[#allocation5 + $0x4] sm:$0xf]
        %v296 = vld [vmem:[#allocation5 + $0x8] sm:$0xf]
        %v297 = vld [vmem:[#allocation5 + $0xc] sm:$0xf]
        %v298 = vld [vmem:[#allocation5 + $0x10] sm:$0xf]
        %v299 = vld [vmem:[#allocation5 + $0x14] sm:$0xf]
        %v300 = vld [vmem:[#allocation5 + $0x18] sm:$0xf]
        %v301 = vld [vmem:[#allocation5 + $0x1c] sm:$0xf]
        %v302 = vld [vmem:[#allocation5 + $0x20] sm:$0xf]
        %v303 = vld [vmem:[#allocation5 + $0x24] sm:$0xf]
        %v304 = vld [vmem:[#allocation5 + $0x28] sm:$0xf]
        %v305 = vld [vmem:[#allocation5 + $0x2c] sm:$0xf]
        %v306 = vld [vmem:[#allocation5 + $0x30] sm:$0xf]
        %v307 = vld [vmem:[#allocation5 + $0x34] sm:$0xf]
        %v308 = vld [vmem:[#allocation5 + $0x38] sm:$0xf]
        %v309 = vld [vmem:[#allocation5 + $0x3c] sm:$0xf]
        %v326 = vunpack.c.l.b16 %v278
        %v327 = vunpack.c.l.b16 %v279
        %v328 = vunpack.c.l.b16 %v280
        %v329 = vunpack.c.l.b16 %v281
        %v330 = vunpack.c.l.b16 %v282
        %v331 = vunpack.c.l.b16 %v283
        %v332 = vunpack.c.l.b16 %v284
        %v333 = vunpack.c.l.b16 %v285
        %v334 = vunpack.c.l.b16 %v286
        %v335 = vunpack.c.l.b16 %v287
        %v336 = vunpack.c.l.b16 %v288
        %v337 = vunpack.c.l.b16 %v289
        %v338 = vunpack.c.l.b16 %v290
        %v339 = vunpack.c.l.b16 %v291
        %v340 = vunpack.c.l.b16 %v292
        %v341 = vunpack.c.l.b16 %v293
        %v342 = vpack.c.b16 %v327, %v326
        %v343 = vpack.c.b16 %v329, %v328
        %v344 = vpack.c.b16 %v331, %v330
        %v345 = vpack.c.b16 %v333, %v332
        %v346 = vpack.c.b16 %v335, %v334
        %v347 = vpack.c.b16 %v337, %v336
        %v348 = vpack.c.b16 %v339, %v338
        %v349 = vpack.c.b16 %v341, %v340
        %v374 = vunpack.c.l.b16 %v294
        %v375 = vunpack.c.l.b16 %v295
        %v376 = vunpack.c.l.b16 %v296
        %v377 = vunpack.c.l.b16 %v297
        %v378 = vunpack.c.l.b16 %v298
        %v379 = vunpack.c.l.b16 %v299
        %v380 = vunpack.c.l.b16 %v300
        %v381 = vunpack.c.l.b16 %v301
        %v382 = vunpack.c.l.b16 %v302
        %v383 = vunpack.c.l.b16 %v303
        %v384 = vunpack.c.l.b16 %v304
        %v385 = vunpack.c.l.b16 %v305
        %v386 = vunpack.c.l.b16 %v306
        %v387 = vunpack.c.l.b16 %v307
        %v388 = vunpack.c.l.b16 %v308
        %v389 = vunpack.c.l.b16 %v309
        %v390 = vpack.c.b16 %v375, %v374
        %v391 = vpack.c.b16 %v377, %v376
        %v392 = vpack.c.b16 %v379, %v378
        %v393 = vpack.c.b16 %v381, %v380
        %v394 = vpack.c.b16 %v383, %v382
        %v395 = vpack.c.b16 %v385, %v384
        %v396 = vpack.c.b16 %v387, %v386
        %v397 = vpack.c.b16 %v389, %v388
        %406 = vmatprep.subr.bf16.mxu0 0
        %407 = vmatpush1.bf16.msra.mxu0 %v390
        %408 = vmatprep.subr.bf16.mxu0 0
        %409 = vmatpush1.bf16.msra.mxu0 %v391
        %410 = vmatprep.subr.bf16.mxu0 0
        %411 = vmatpush1.bf16.msra.mxu0 %v392
        %412 = vmatprep.subr.bf16.mxu0 0
        %413 = vmatpush1.bf16.msra.mxu0 %v393
        %414 = vmatprep.subr.bf16.mxu0 0
        %415 = vmatpush1.bf16.msra.mxu0 %v394
        %416 = vmatprep.subr.bf16.mxu0 0
        %417 = vmatpush1.bf16.msra.mxu0 %v395
        %418 = vmatprep.subr.bf16.mxu0 0
        %419 = vmatpush1.bf16.msra.mxu0 %v396
        %420 = vmatprep.subr.bf16.mxu0 0
        %421 = vmatpush1.bf16.msra.mxu0 %v397
        %422 = vmatprep.subr.bf16.mxu0 0
        %423 = vmatpush1.bf16.msra.mxu0 0
        %424 = vmatprep.subr.bf16.mxu0 0
        %425 = vmatpush1.bf16.msra.mxu0 0
        %426 = vmatprep.subr.bf16.mxu0 0
        %427 = vmatpush1.bf16.msra.mxu0 0
        %428 = vmatprep.subr.bf16.mxu0 0
        %429 = vmatpush1.bf16.msra.mxu0 0
        %430 = vmatprep.subr.bf16.mxu0 0
        %431 = vmatpush1.bf16.msra.mxu0 0
        %432 = vmatprep.subr.bf16.mxu0 0
        %433 = vmatpush1.bf16.msra.mxu0 0
        %434 = vmatprep.subr.bf16.mxu0 0
        %435 = vmatpush1.bf16.msra.mxu0 0
        %436 = vmatprep.subr.bf16.mxu0 0
        %437 = vmatpush1.bf16.msra.mxu0 0
        %438 = vmatprep.mubr.bf16.mxu0 0
        %439 = vmatmul.mubr.bf16.gmra.mrb[0].mxu0 %v342
        %v440 = vpop.f32.mrb[0].mxu0
        %v441 = vadd.f32 0.0, %v440
        %v442 = vpop.f32.mrb[0].mxu0
        %v443 = vpop.f32.mrb[0].mxu0
        %v444 = vadd.f32 0.0, %v443
        %v445 = vpop.f32.mrb[0].mxu0
        %446 = vmatprep.mubr.bf16.mxu0 0
        %447 = vmatmul.mubr.bf16.gmra.mrb[0].mxu0 %v343
        %v448 = vpop.f32.mrb[0].mxu0
        %v449 = vadd.f32 0.0, %v448
        %v450 = vpop.f32.mrb[0].mxu0
        %v451 = vpop.f32.mrb[0].mxu0
        %v452 = vadd.f32 0.0, %v451
        %v453 = vpop.f32.mrb[0].mxu0
        %454 = vmatprep.mubr.bf16.mxu0 0
        %455 = vmatmul.mubr.bf16.gmra.mrb[0].mxu0 %v344
        %v456 = vpop.f32.mrb[0].mxu0
        %v457 = vadd.f32 0.0, %v456
        %v458 = vpop.f32.mrb[0].mxu0
        %v459 = vpop.f32.mrb[0].mxu0
        %v460 = vadd.f32 0.0, %v459
        %v461 = vpop.f32.mrb[0].mxu0
        %462 = vmatprep.mubr.bf16.mxu0 0
        %463 = vmatmul.mubr.bf16.gmra.mrb[0].mxu0 %v345
        %v464 = vpop.f32.mrb[0].mxu0
        %v465 = vadd.f32 0.0, %v464
        %v466 = vpop.f32.mrb[0].mxu0
        %v467 = vpop.f32.mrb[0].mxu0
        %v468 = vadd.f32 0.0, %v467
        %v469 = vpop.f32.mrb[0].mxu0
        %470 = vmatprep.mubr.bf16.mxu0 0
        %471 = vmatmul.mubr.bf16.gmra.mrb[0].mxu0 %v346
        %v472 = vpop.f32.mrb[0].mxu0
        %v473 = vadd.f32 0.0, %v472
        %v474 = vpop.f32.mrb[0].mxu0
        %v475 = vpop.f32.mrb[0].mxu0
        %v476 = vadd.f32 0.0, %v475
        %v477 = vpop.f32.mrb[0].mxu0
        %478 = vmatprep.mubr.bf16.mxu0 0
        %479 = vmatmul.mubr.bf16.gmra.mrb[0].mxu0 %v347
        %v480 = vpop.f32.mrb[0].mxu0
        %v481 = vadd.f32 0.0, %v480
        %v482 = vpop.f32.mrb[0].mxu0
        %v483 = vpop.f32.mrb[0].mxu0
        %v484 = vadd.f32 0.0, %v483
        %v485 = vpop.f32.mrb[0].mxu0
        %486 = vmatprep.mubr.bf16.mxu0 0
        %487 = vmatmul.mubr.bf16.gmra.mrb[0].mxu0 %v348
        %v488 = vpop.f32.mrb[0].mxu0
        %v489 = vadd.f32 0.0, %v488
        %v490 = vpop.f32.mrb[0].mxu0
        %v491 = vpop.f32.mrb[0].mxu0
        %v492 = vadd.f32 0.0, %v491
        %v493 = vpop.f32.mrb[0].mxu0
        %494 = vmatprep.mubr.bf16.mxu0 0
        %495 = vmatmul.mubr.bf16.gmra.mrb[0].mxu0 %v349
        %v496 = vpop.f32.mrb[0].mxu0
        %v497 = vadd.f32 0.0, %v496
        %v498 = vpop.f32.mrb[0].mxu0
        %v499 = vpop.f32.mrb[0].mxu0
        %v500 = vadd.f32 0.0, %v499
        %v501 = vpop.f32.mrb[0].mxu0
        %502 = vdwg.mxu0
        %v503 = vpack.c.bf16 %v444, %v441
        %v504 = vpack.c.bf16 %v452, %v449
        %v505 = vpack.c.bf16 %v460, %v457
        %v506 = vpack.c.bf16 %v468, %v465
        %v507 = vpack.c.bf16 %v476, %v473
        %v508 = vpack.c.bf16 %v484, %v481
        %v509 = vpack.c.bf16 %v492, %v489
        %v510 = vpack.c.bf16 %v500, %v497
        %v519 = vunpack.c.l.b16 %v503
        %v520 = vunpack.c.h.b16 %v503
        %v521 = vunpack.c.l.b16 %v504
        %v522 = vunpack.c.h.b16 %v504
        %v523 = vunpack.c.l.b16 %v505
        %v524 = vunpack.c.h.b16 %v505
        %v525 = vunpack.c.l.b16 %v506
        %v526 = vunpack.c.h.b16 %v506
        %v527 = vunpack.c.l.b16 %v507
        %v528 = vunpack.c.h.b16 %v507
        %v529 = vunpack.c.l.b16 %v508
        %v530 = vunpack.c.h.b16 %v508
        %v531 = vunpack.c.l.b16 %v509
        %v532 = vunpack.c.h.b16 %v509
        %v533 = vunpack.c.l.b16 %v510
        %v534 = vunpack.c.h.b16 %v510
        %v535 = vpack.c.b16 %v519, %v519
        %v536 = vpack.c.b16 %v520, %v520
        %v537 = vpack.c.b16 %v521, %v521
        %v538 = vpack.c.b16 %v522, %v522
        %v539 = vpack.c.b16 %v523, %v523
        %v540 = vpack.c.b16 %v524, %v524
        %v541 = vpack.c.b16 %v525, %v525
        %v542 = vpack.c.b16 %v526, %v526
        %v543 = vpack.c.b16 %v527, %v527
        %v544 = vpack.c.b16 %v528, %v528
        %v545 = vpack.c.b16 %v529, %v529
        %v546 = vpack.c.b16 %v530, %v530
        %v547 = vpack.c.b16 %v531, %v531
        %v548 = vpack.c.b16 %v532, %v532
        %v549 = vpack.c.b16 %v533, %v533
        %v550 = vpack.c.b16 %v534, %v534
        %567 = vst [vmem:[%s256] sm:$0xf] %v535
        %568 = vst [vmem:[%s256 + $0x4] sm:$0xf] %v536
        %569 = vst [vmem:[%s256 + $0x8] sm:$0xf] %v537
        %570 = vst [vmem:[%s256 + $0xc] sm:$0xf] %v538
        %571 = vst [vmem:[%s256 + $0x10] sm:$0xf] %v539
        %572 = vst [vmem:[%s256 + $0x14] sm:$0xf] %v540
        %573 = vst [vmem:[%s256 + $0x18] sm:$0xf] %v541
        %574 = vst [vmem:[%s256 + $0x1c] sm:$0xf] %v542
        %575 = vst [vmem:[%s256 + $0x20] sm:$0xf] %v543
        %576 = vst [vmem:[%s256 + $0x24] sm:$0xf] %v544
        %577 = vst [vmem:[%s256 + $0x28] sm:$0xf] %v545
        %578 = vst [vmem:[%s256 + $0x2c] sm:$0xf] %v546
        %579 = vst [vmem:[%s256 + $0x30] sm:$0xf] %v547
        %580 = vst [vmem:[%s256 + $0x34] sm:$0xf] %v548
        %581 = vst [vmem:[%s256 + $0x38] sm:$0xf] %v549
        %582 = vst [vmem:[%s256 + $0x3c] sm:$0xf] %v550
        %p583 = scmp.eq.s32.totalorder %s31, 0
        // Predicated region
        $region37: #{tpu_custom_call.1} parent=27 // pred_check
          %p584 = pneg %p583
        $region38: #{tpu_custom_call.1} parent=27 // pred_check_branch
          %586 = sbr.rel (%p584) target = $region40
        $region39: #{tpu_custom_call.1} parent=27 // pred_region
          %587 = vst [vmem:[%s263] sm:$0xff] 0.0
          %588 = vst [vmem:[%s270] sm:$0xff] 0.0
        $region40: #{tpu_custom_call.1} parent=27 // pred_fallthru
          _
        %s589 = smul.u32 %s30, 2
        %s590 = sadd.s32 %s589, %s31
        %p591 = scmp.lt.s32.totalorder %s590, 0
        %s592 = ssub.s32 0, %s590
        %s593 = scalar_select %p591, %s592, %s590
        %s594 = sand.u32 %s593, 1
        %s595 = ssub.s32 0, %s594
        %s596 = scalar_select %p591, %s595, %s594
        %p597 = scmp.ne.s32.totalorder %s596, 0
        %p598 = scmp.lt.s32.totalorder %s596, 0
        %p599 = pnand %p598, %p597
        %p600 = pneg %p599
        %s601 = sadd.s32 %s596, 2
        %s602 = scalar_select %p600, %s601, %s596
        %s603 = smul.u32 %s602, 128
        %s604 = sadd.s32 %s603, 128
        %p605 = scmp.gt.s32.totalorder %s604, 200
        %p606 = scmp.le.s32.totalorder %s604, 200
        // Predicated region
        $region41: #{tpu_custom_call.1} parent=27 // pred_check
          %p607 = pneg %p606
        $region42: #{tpu_custom_call.1} parent=27 // pred_check_branch
          %609 = sbr.rel (%p607) target = $region44
        $region43: #{tpu_custom_call.1} parent=27 // pred_region
          %v610 = vld [vmem:[%s263] sm:$0x1]
          %v611 = vadd.f32 %v441, %v444
          %v612 = vadd.f32 %v611, %v449
          %v613 = vadd.f32 %v612, %v452
          %v614 = vadd.f32 %v613, %v457
          %v615 = vadd.f32 %v614, %v460
          %v616 = vadd.f32 %v615, %v465
          %v617 = vadd.f32 %v616, %v468
          %v618 = vadd.f32 %v617, %v473
          %v619 = vadd.f32 %v618, %v476
          %v620 = vadd.f32 %v619, %v481
          %v621 = vadd.f32 %v620, %v484
          %v622 = vadd.f32 %v621, %v489
          %v623 = vadd.f32 %v622, %v492
          %v624 = vadd.f32 %v623, %v497
          %v625 = vadd.f32 %v624, %v500
          %v626 = vrot.slane %v625, 4
          %v627 = vadd.f32 %v625, %v626
          %v628 = vrot.slane %v627, 2
          %v629 = vadd.f32 %v627, %v628
          %v630 = vrot.slane %v629, 1
          %v631 = vadd.f32 %v629, %v630
          %v632 = vadd.f32 %v610, %v631
          %633 = vst [vmem:[%s263] sm:$0x1] %v632
          %v634 = vld [vmem:[%s270] sm:$0x1]
          %v635 = vmul.f32 %v441, %v441
          %v636 = vmul.f32 %v444, %v444
          %v637 = vmul.f32 %v449, %v449
          %v638 = vmul.f32 %v452, %v452
          %v639 = vmul.f32 %v457, %v457
          %v640 = vmul.f32 %v460, %v460
          %v641 = vmul.f32 %v465, %v465
          %v642 = vmul.f32 %v468, %v468
          %v643 = vmul.f32 %v473, %v473
          %v644 = vmul.f32 %v476, %v476
          %v645 = vmul.f32 %v481, %v481
          %v646 = vmul.f32 %v484, %v484
          %v647 = vmul.f32 %v489, %v489
          %v648 = vmul.f32 %v492, %v492
          %v649 = vmul.f32 %v497, %v497
          %v650 = vmul.f32 %v500, %v500
          %v651 = vadd.f32 %v635, %v636
          %v652 = vadd.f32 %v651, %v637
          %v653 = vadd.f32 %v652, %v638
          %v654 = vadd.f32 %v653, %v639
          %v655 = vadd.f32 %v654, %v640
          %v656 = vadd.f32 %v655, %v641
          %v657 = vadd.f32 %v656, %v642
          %v658 = vadd.f32 %v657, %v643
          %v659 = vadd.f32 %v658, %v644
          %v660 = vadd.f32 %v659, %v645
          %v661 = vadd.f32 %v660, %v646
          %v662 = vadd.f32 %v661, %v647
          %v663 = vadd.f32 %v662, %v648
          %v664 = vadd.f32 %v663, %v649
          %v665 = vadd.f32 %v664, %v650
          %v666 = vrot.slane %v665, 4
          %v667 = vadd.f32 %v665, %v666
          %v668 = vrot.slane %v667, 2
          %v669 = vadd.f32 %v667, %v668
          %v670 = vrot.slane %v669, 1
          %v671 = vadd.f32 %v669, %v670
          %v672 = vadd.f32 %v634, %v671
          %673 = vst [vmem:[%s270] sm:$0x1] %v672
        $region44: #{tpu_custom_call.1} parent=27 // pred_fallthru
          _
        // Predicated region
        $region45: #{tpu_custom_call.1} parent=27 // pred_check
          %p674 = pneg %p605
        $region46: #{tpu_custom_call.1} parent=27 // pred_check_branch
          %676 = sbr.rel (%p674) target = $region48
        $region47: #{tpu_custom_call.1} parent=27 // pred_region
          %v677 = vlaneseq
          %v678 = vshrl.u32 %v677, 7
          %v679 = vadd.s32 %v678, 8
          %v680 = vadd.s32 %v678, 16
          %v681 = vadd.s32 %v678, 24
          %v682 = vadd.s32 %v678, 32
          %v683 = vadd.s32 %v678, 40
          %v684 = vadd.s32 %v678, 48
          %v685 = vadd.s32 %v678, 56
          %v686 = vadd.s32 %v678, 64
          %v687 = vadd.s32 %v678, 72
          %v688 = vadd.s32 %v678, 80
          %v689 = vadd.s32 %v678, 88
          %v690 = vadd.s32 %v678, 96
          %v691 = vadd.s32 %v678, 104
          %v692 = vadd.s32 %v678, 112
          %v693 = vadd.s32 %v678, 120
          %s694 = ssub.s32 200, %s603
          %v695 = vstv %s694
          %vm696 = vcmp.lt.s32.totalorder %v678, %v695
          %vm697 = vcmp.lt.s32.totalorder %v679, %v695
          %vm698 = vcmp.lt.s32.totalorder %v680, %v695
          %vm699 = vcmp.lt.s32.totalorder %v681, %v695
          %vm700 = vcmp.lt.s32.totalorder %v682, %v695
          %vm701 = vcmp.lt.s32.totalorder %v683, %v695
          %vm702 = vcmp.lt.s32.totalorder %v684, %v695
          %vm703 = vcmp.lt.s32.totalorder %v685, %v695
          %vm704 = vcmp.lt.s32.totalorder %v686, %v695
          %vm705 = vcmp.lt.s32.totalorder %v687, %v695
          %vm706 = vcmp.lt.s32.totalorder %v688, %v695
          %vm707 = vcmp.lt.s32.totalorder %v689, %v695
          %vm708 = vcmp.lt.s32.totalorder %v690, %v695
          %vm709 = vcmp.lt.s32.totalorder %v691, %v695
          %vm710 = vcmp.lt.s32.totalorder %v692, %v695
          %vm711 = vcmp.lt.s32.totalorder %v693, %v695
          %v712 = vsel %vm696, 1, 0
          %v713 = vsel %vm697, 1, 0
          %v714 = vsel %vm698, 1, 0
          %v715 = vsel %vm699, 1, 0
          %v716 = vsel %vm700, 1, 0
          %v717 = vsel %vm701, 1, 0
          %v718 = vsel %vm702, 1, 0
          %v719 = vsel %vm703, 1, 0
          %v720 = vsel %vm704, 1, 0
          %v721 = vsel %vm705, 1, 0
          %v722 = vsel %vm706, 1, 0
          %v723 = vsel %vm707, 1, 0
          %v724 = vsel %vm708, 1, 0
          %v725 = vsel %vm709, 1, 0
          %v726 = vsel %vm710, 1, 0
          %v727 = vsel %vm711, 1, 0
          %vm728 = vcmp.eq.s32.totalorder %v712, 1
          %vm729 = vcmp.eq.s32.totalorder %v713, 1
          %vm730 = vcmp.eq.s32.totalorder %v714, 1
          %vm731 = vcmp.eq.s32.totalorder %v715, 1
          %vm732 = vcmp.eq.s32.totalorder %v716, 1
          %vm733 = vcmp.eq.s32.totalorder %v717, 1
          %vm734 = vcmp.eq.s32.totalorder %v718, 1
          %vm735 = vcmp.eq.s32.totalorder %v719, 1
          %vm736 = vcmp.eq.s32.totalorder %v720, 1
          %vm737 = vcmp.eq.s32.totalorder %v721, 1
          %vm738 = vcmp.eq.s32.totalorder %v722, 1
          %vm739 = vcmp.eq.s32.totalorder %v723, 1
          %vm740 = vcmp.eq.s32.totalorder %v724, 1
          %vm741 = vcmp.eq.s32.totalorder %v725, 1
          %vm742 = vcmp.eq.s32.totalorder %v726, 1
          %vm743 = vcmp.eq.s32.totalorder %v727, 1
          %v744 = vsel %vm728, %v441, 0.0
          %v745 = vsel %vm729, %v444, 0.0
          %v746 = vsel %vm730, %v449, 0.0
          %v747 = vsel %vm731, %v452, 0.0
          %v748 = vsel %vm732, %v457, 0.0
          %v749 = vsel %vm733, %v460, 0.0
          %v750 = vsel %vm734, %v465, 0.0
          %v751 = vsel %vm735, %v468, 0.0
          %v752 = vsel %vm736, %v473, 0.0
          %v753 = vsel %vm737, %v476, 0.0
          %v754 = vsel %vm738, %v481, 0.0
          %v755 = vsel %vm739, %v484, 0.0
          %v756 = vsel %vm740, %v489, 0.0
          %v757 = vsel %vm741, %v492, 0.0
          %v758 = vsel %vm742, %v497, 0.0
          %v759 = vsel %vm743, %v500, 0.0
          %v760 = vld [vmem:[%s263] sm:$0x1]
          %v761 = vadd.f32 %v744, %v745
          %v762 = vadd.f32 %v761, %v746
          %v763 = vadd.f32 %v762, %v747
          %v764 = vadd.f32 %v763, %v748
          %v765 = vadd.f32 %v764, %v749
          %v766 = vadd.f32 %v765, %v750
          %v767 = vadd.f32 %v766, %v751
          %v768 = vadd.f32 %v767, %v752
          %v769 = vadd.f32 %v768, %v753
          %v770 = vadd.f32 %v769, %v754
          %v771 = vadd.f32 %v770, %v755
          %v772 = vadd.f32 %v771, %v756
          %v773 = vadd.f32 %v772, %v757
          %v774 = vadd.f32 %v773, %v758
          %v775 = vadd.f32 %v774, %v759
          %v776 = vrot.slane %v775, 4
          %v777 = vadd.f32 %v775, %v776
          %v778 = vrot.slane %v777, 2
          %v779 = vadd.f32 %v777, %v778
          %v780 = vrot.slane %v779, 1
          %v781 = vadd.f32 %v779, %v780
          %v782 = vadd.f32 %v760, %v781
          %783 = vst [vmem:[%s263] sm:$0x1] %v782
          %v784 = vld [vmem:[%s270] sm:$0x1]
          %v785 = vmul.f32 %v744, %v744
          %v786 = vmul.f32 %v745, %v745
          %v787 = vmul.f32 %v746, %v746
          %v788 = vmul.f32 %v747, %v747
          %v789 = vmul.f32 %v748, %v748
          %v790 = vmul.f32 %v749, %v749
          %v791 = vmul.f32 %v750, %v750
          %v792 = vmul.f32 %v751, %v751
          %v793 = vmul.f32 %v752, %v752
          %v794 = vmul.f32 %v753, %v753
          %v795 = vmul.f32 %v754, %v754
          %v796 = vmul.f32 %v755, %v755
          %v797 = vmul.f32 %v756, %v756
          %v798 = vmul.f32 %v757, %v757
          %v799 = vmul.f32 %v758, %v758
          %v800 = vmul.f32 %v759, %v759
          %v801 = vadd.f32 %v785, %v786
          %v802 = vadd.f32 %v801, %v787
          %v803 = vadd.f32 %v802, %v788
          %v804 = vadd.f32 %v803, %v789
          %v805 = vadd.f32 %v804, %v790
          %v806 = vadd.f32 %v805, %v791
          %v807 = vadd.f32 %v806, %v792
          %v808 = vadd.f32 %v807, %v793
          %v809 = vadd.f32 %v808, %v794
          %v810 = vadd.f32 %v809, %v795
          %v811 = vadd.f32 %v810, %v796
          %v812 = vadd.f32 %v811, %v797
          %v813 = vadd.f32 %v812, %v798
          %v814 = vadd.f32 %v813, %v799
          %v815 = vadd.f32 %v814, %v800
          %v816 = vrot.slane %v815, 4
          %v817 = vadd.f32 %v815, %v816
          %v818 = vrot.slane %v817, 2
          %v819 = vadd.f32 %v817, %v818
          %v820 = vrot.slane %v819, 1
          %v821 = vadd.f32 %v819, %v820
          %v822 = vadd.f32 %v784, %v821
          %823 = vst [vmem:[%s270] sm:$0x1] %v822
        $region48: #{tpu_custom_call.1} parent=27 // pred_fallthru
          _
        %s824 = sand.u32 %s101, 1
        %s825 = scalar_lea.sflag [#allocation4], %s824
        %s826 = sand.u32 %s101, 1
        %s827 = smul.addr %s826, 64
        %s828 = scalar_lea.vmem [#allocation7], %s827
        %s829 = sand.u32 %s26, 1
        %s830 = scalar_lea.sflag [#allocation9], %s829
        %s831 = sand.u32 %s127, 1
        %s832 = smul.addr %s831, 8
        %s833 = scalar_lea.vmem [#allocation8], %s832
        %s834 = sand.u32 %s26, 1
        %s835 = scalar_lea.sflag [#allocation9], %s834
        %s836 = sand.u32 %s153, 1
        %s837 = smul.addr %s836, 8
        %s838 = scalar_lea.vmem [#allocation10], %s837
        // Predicated region
        $region49: #{tpu_custom_call.1} parent=27 // pred_check
          %p839 = pneg %p111
        $region50: #{tpu_custom_call.1} parent=27 // pred_check_branch
          %841 = sbr.rel (%p839) target = $region52
        $region51: #{tpu_custom_call.1} parent=27 // pred_region
          %s842 = smul.u32 %s30, 2
          %s843 = sadd.s32 %s842, %s31
          %s844 = smul.u32 16, %s843
          %s846 = ssub.s32 1024, 1024
          %847 = vsyncadd %s825, %s846
          %s848 = smul.addr %s844, 64
          %s849 = scalar_lea.hbm %s2, %s848
          %s850 = sshll.u32 %s828, 4
          %s851 = int_to_ptr.vmem [resolvable:$true] %s850
          %856 = dma.vmem_to_hbm [thread:$0]  %s851, 1024, %s849, %s825, 64, 64, 4
        $region52: #{tpu_custom_call.1} parent=27 // pred_fallthru
          _
        // Predicated region
        $region53: #{tpu_custom_call.1} parent=27 // pred_check
          %p857 = pneg %p137
        $region54: #{tpu_custom_call.1} parent=27 // pred_check_branch
          %859 = sbr.rel (%p857) target = $region56
        $region55: #{tpu_custom_call.1} parent=27 // pred_region
          %s861 = ssub.s32 128, 128
          %862 = vsyncadd %s830, %s861
          %s863 = smul.addr %s30, 128
          %s864 = scalar_lea.hbm %s3, %s863
          %s866 = sshll.u32 %s833, 4
          %s867 = int_to_ptr.vmem [resolvable:$true] %s866
          %869 = dma.vmem_to_hbm [thread:$0]  %s867, 128, %s864, %s830
        $region56: #{tpu_custom_call.1} parent=27 // pred_fallthru
          _
        // Predicated region
        $region57: #{tpu_custom_call.1} parent=27 // pred_check
          %p870 = pneg %p163
        $region58: #{tpu_custom_call.1} parent=27 // pred_check_branch
          %872 = sbr.rel (%p870) target = $region60
        $region59: #{tpu_custom_call.1} parent=27 // pred_region
          %s874 = ssub.s32 128, 128
          %875 = vsyncadd %s835, %s874
          %s876 = smul.addr %s30, 128
          %s877 = scalar_lea.hbm %s4, %s876
          %s879 = sshll.u32 %s838, 4
          %s880 = int_to_ptr.vmem [resolvable:$true] %s879
          %882 = dma.vmem_to_hbm [thread:$0]  %s880, 128, %s877, %s835
        $region60: #{tpu_custom_call.1} parent=27 // pred_fallthru
          _
      $region28: #{tpu_custom_call.1} parent=5 // pred_fallthru
        _
      %p883 = scmp.le.s32.totalorder 2, %s21
      // Predicated region
      $region61: #{tpu_custom_call.1} parent=5 // pred_check
        %p884 = pneg %p883
      $region62: #{tpu_custom_call.1} parent=5 // pred_check_branch
        %886 = sbr.rel (%p884) target = $region64
      $region63: #{tpu_custom_call.1} parent=5 // pred_region
        %s887 = ssub.s32 %s21, 2
        // Predicated region
        $region65: #{tpu_custom_call.1} parent=63 // pred_check
          %p888 = pneg %p117
        $region66: #{tpu_custom_call.1} parent=63 // pred_check_branch
          %890 = sbr.rel (%p888) target = $region68
        $region67: #{tpu_custom_call.1} parent=63 // pred_region
          %s891 = sand.u32 %s102, 1
          %s892 = scalar_lea.sflag [#allocation4], %s891
          %s893 = sand.u32 %s102, 1
          %s894 = smul.addr %s893, 64
          %s895 = scalar_lea.vmem [#allocation7], %s894
          %896 = dma.done %s892, 1024
        $region68: #{tpu_custom_call.1} parent=63 // pred_fallthru
          _
        // Predicated region
        $region69: #{tpu_custom_call.1} parent=63 // pred_check
          %p897 = pneg %p143
        $region70: #{tpu_custom_call.1} parent=63 // pred_check_branch
          %899 = sbr.rel (%p897) target = $region72
        $region71: #{tpu_custom_call.1} parent=63 // pred_region
          %s900 = sand.u32 %s27, 1
          %s901 = scalar_lea.sflag [#allocation9], %s900
          %s902 = sand.u32 %s128, 1
          %s903 = smul.addr %s902, 8
          %s904 = scalar_lea.vmem [#allocation8], %s903
          %905 = dma.done %s901, 128
        $region72: #{tpu_custom_call.1} parent=63 // pred_fallthru
          _
        // Predicated region
        $region73: #{tpu_custom_call.1} parent=63 // pred_check
          %p906 = pneg %p169
        $region74: #{tpu_custom_call.1} parent=63 // pred_check_branch
          %908 = sbr.rel (%p906) target = $region76
        $region75: #{tpu_custom_call.1} parent=63 // pred_region
          %s909 = sand.u32 %s27, 1
          %s910 = scalar_lea.sflag [#allocation9], %s909
          %s911 = sand.u32 %s154, 1
          %s912 = smul.addr %s911, 8
          %s913 = scalar_lea.vmem [#allocation10], %s912
          %914 = dma.done %s910, 128
        $region76: #{tpu_custom_call.1} parent=63 // pred_fallthru
          _
      $region64: #{tpu_custom_call.1} parent=5 // pred_fallthru
        _
    $region6: #{tpu_custom_call.1} parent=1 // loop_footer
      %s25 = sadd.s32 1, %s21
    $region7: #{tpu_custom_call.1} parent=1 // loop_footer_branch
      %20 = sbr.rel target = $region3
    $region8: #{tpu_custom_call.1} parent=1 // loop_exit
      _
    %915 = vsyncpa [#allocation3], 1
    %s916 = scalar_lea.sflag [#allocation3], 1
    %917 = vsyncpa %s916, 1
    %918 = vsyncpa [#allocation6], 1
    %919 = vsyncpa [#allocation4], 1
    %s920 = scalar_lea.sflag [#allocation4], 1
    %921 = vsyncpa %s920, 1
    %922 = vsyncpa [#allocation9], 1
    %s923 = scalar_lea.sflag [#allocation9], 1
    %924 = vsyncpa %s923, 1

</llo_original>
